<compile_context>
chip_gen: v5e
topology: v5e:2x2
jax: 0.10.0
libtpu: 0.0.40
codegen_flags: <defaults>
</compile_context>

<pallas_src>
import functools

import jax
import jax.numpy as jnp
from jax.experimental import pallas as pl
from jax.experimental.pallas import tpu as pltpu


KERNEL_SIZE = 5                       # matches ECA(kernel_size=5)
PAD = (KERNEL_SIZE - 1) // 2
_MIB = 1024 * 1024


def _round_up(x, m):
    return (x + m - 1) // m * m


def _cdiv(a, b):
    return (a + b - 1) // b


def _vmem_capacity_bytes():
    try:
        return int(pltpu.get_tpu_info().vmem_capacity_bytes)
    except Exception:
        return 64 * _MIB                         # conservative (v7x-sized) default


def _vmem_plan():
    """(vmem_limit_bytes, per-step block budget) derived from the chip generation."""
    cap = _vmem_capacity_bytes()
    limit = int(max(32 * _MIB, min(100 * _MIB, (cap * 7) // 10)))
    budget = (limit * 4) // 5 - 2 * _MIB         # headroom for scratch + Mosaic internals
    return limit, int(max(budget, 4 * _MIB))


def _choose_tb(batch, tb_max):
    """Largest divisor of `batch` <= tb_max, preferring >=2 (and even) grid step counts."""
    divs = [d for d in range(1, batch + 1) if batch % d == 0 and d <= max(1, tb_max)]
    if not divs:
        return 1
    if batch >= 2:
        multi = [d for d in divs if batch // d >= 2]
        if multi:
            divs = multi
    even = [d for d in divs if (batch // d) % 2 == 0]
    return max(even) if even else max(divs)


def _conv5_sigmoid(mean_padded, w_ref, c_real):
    """k=5 'same' cross-correlation over the channel (lane) axis + sigmoid.

    mean_padded: (TB, 1, Cp) f32 value, Cp a multiple of 128.  Lanes >= c_real are
                 ignored (masked out of every tap and sliced away by the caller).
    w_ref      : SMEM (KERNEL_SIZE,) f32 weights.
    """
    cp = mean_padded.shape[-1]
    lane = jax.lax.broadcasted_iota(jnp.int32, mean_padded.shape, mean_padded.ndim - 1)
    conv = jnp.zeros_like(mean_padded)
    for t in range(KERNEL_SIZE):
        d = t - PAD                               # out[c] += w[t] * mean[c + d]
        if d == 0:
            shifted = mean_padded
        else:
            shifted = pltpu.roll(mean_padded, shift=(-d) % cp, axis=mean_padded.ndim - 1)
        valid = jnp.logical_and(lane + d >= 0, lane + d < c_real)
        conv = conv + w_ref[t] * jnp.where(valid, shifted, jnp.zeros_like(shifted))
    return jax.nn.sigmoid(conv)


# --------------------------- single-slab (one pass) kernels ---------------------------

def _slab_kernel_nomask(w_ref, x_ref, o_ref, mean_ref, *, c_real, inv_l):
    # x_ref/o_ref: (TB, L, C); w_ref: SMEM (5,); mean_ref: VMEM (TB, 1, Cp) f32 scratch.
    mean = jnp.sum(x_ref[...].astype(jnp.float32), axis=1, keepdims=True) * inv_l
    mean_ref[...] = jnp.zeros(mean_ref.shape, jnp.float32)
    mean_ref[:, :, :c_real] = mean
    attn = _conv5_sigmoid(mean_ref[...], w_ref, c_real)[:, :, :c_real]
    o_ref[...] = (x_ref[...] * attn.astype(o_ref.dtype)).astype(o_ref.dtype)


def _slab_kernel_mask(w_ref, x_ref, m_ref, o_ref, mean_ref, *, c_real):
    # m_ref: (TB, L, 1) {0,1} values in the input dtype (product with x is exact).
    num = jnp.sum((x_ref[...] * m_ref[...]).astype(jnp.float32), axis=1, keepdims=True)
    den = jnp.sum(m_ref[...].astype(jnp.float32), axis=1, keepdims=True)
    mean_ref[...] = jnp.zeros(mean_ref.shape, jnp.float32)
    mean_ref[:, :, :c_real] = num / den           # masked mean == torch nanmean
    attn = _conv5_sigmoid(mean_ref[...], w_ref, c_real)[:, :, :c_real]
    o_ref[...] = (x_ref[...] * m_ref[...] * attn.astype(o_ref.dtype)).astype(o_ref.dtype)


# ----------------------- L-tiled two-pass fallback (large L*C) ------------------------

def _attn_kernel_nomask(w_ref, x_ref, attn_ref, acc_ref, *, c_real, l_real, tl):
    li = pl.program_id(1)

    @pl.when(li == 0)
    def _():
        acc_ref[...] = jnp.zeros(acc_ref.shape, jnp.float32)

    xblk = x_ref[...]                                              # (1, TL, C)
    row = jax.lax.broadcasted_iota(jnp.int32, xblk.shape, 1) + li * tl
    xv = jnp.where(row < l_real, xblk, jnp.zeros_like(xblk))       # guard ragged tail
    acc_ref[:, :, :c_real] = acc_ref[:, :, :c_real] + jnp.sum(
        xv.astype(jnp.float32), axis=1, keepdims=True)

    @pl.when(li == pl.num_programs(1) - 1)
    def _():
        mean = acc_ref[...] * (1.0 / l_real)
        attn = _conv5_sigmoid(mean, w_ref, c_real)[:, :, :c_real]
        attn_ref[...] = attn.astype(attn_ref.dtype)


def _attn_kernel_mask(w_ref, x_ref, m_ref, attn_ref, acc_ref, den_ref,
                      *, c_real, l_real, tl):
    li = pl.program_id(1)

    @pl.when(li == 0)
    def _():
        acc_ref[...] = jnp.zeros(acc_ref.shape, jnp.float32)
        den_ref[...] = jnp.zeros(den_ref.shape, jnp.float32)

    xblk = x_ref[...]                                              # (1, TL, C)
    mblk = m_ref[...]                                              # (1, TL, 1)
    rowx = jax.lax.broadcasted_iota(jnp.int32, xblk.shape, 1) + li * tl
    rowm = jax.lax.broadcasted_iota(jnp.int32, mblk.shape, 1) + li * tl
    xv = jnp.where(rowx < l_real, xblk, jnp.zeros_like(xblk))      # guard ragged tail
    mv = jnp.where(rowm < l_real, mblk, jnp.zeros_like(mblk))
    acc_ref[:, :, :c_real] = acc_ref[:, :, :c_real] + jnp.sum(
        (xv * mv).astype(jnp.float32), axis=1, keepdims=True)
    den_ref[...] = den_ref[...] + jnp.sum(mv.astype(jnp.float32), axis=1, keepdims=True)

    @pl.when(li == pl.num_programs(1) - 1)
    def _():
        mean = acc_ref[...] / den_ref[...]
        attn = _conv5_sigmoid(mean, w_ref, c_real)[:, :, :c_real]
        attn_ref[...] = attn.astype(attn_ref.dtype)


def _apply_kernel_nomask(attn_ref, x_ref, o_ref):
    o_ref[...] = (x_ref[...] * attn_ref[...].astype(o_ref.dtype)).astype(o_ref.dtype)


def _apply_kernel_mask(attn_ref, x_ref, m_ref, o_ref):
    o_ref[...] = (x_ref[...] * m_ref[...]
                  * attn_ref[...].astype(o_ref.dtype)).astype(o_ref.dtype)


# --------------------------------------- wrapper ---------------------------------------

def eca_forward(x, conv_weight, seq_mask=None, *, force_tiled=False, tile_l=None):
    """ECA forward.  x: (B, L, C); conv_weight: (5,) or (1,1,5); seq_mask: optional (B, L)."""
    B, L, C = x.shape
    w = jnp.asarray(conv_weight, jnp.float32).reshape(-1)
    assert w.shape[0] == KERNEL_SIZE

    itemsize = jnp.dtype(x.dtype).itemsize
    Cp = _round_up(C, 128)
    vmem_limit, budget = _vmem_plan()

    mask = None
    if seq_mask is not None:
        mask = jnp.asarray(seq_mask, x.dtype).reshape(B, L)[:, :, None]   # (B, L, 1)

    # Honest per-batch VMEM footprint for the single-slab path: x + out double-buffered
    # DMA windows, one transient (widened-reduce) slab, and the mask block whose lane
    # dim pads to 128 in VMEM.
    mask_b = 2 * _round_up(L, 8) * 128 * itemsize if mask is not None else 0
    per_b = 4 * L * C * itemsize + L * C * (itemsize + 4) + mask_b

    smem_spec = pl.BlockSpec(memory_space=pltpu.MemorySpace.SMEM)

    # ------------------------- single-pass path (fits VMEM) -------------------------
    if not force_tiled and per_b <= budget:
        TB = _choose_tb(B, budget // per_b)
        nb = B // TB
        block_xo = pl.BlockSpec((TB, L, C), lambda b: (b, 0, 0))
        scratch = [pltpu.VMEM((TB, 1, Cp), jnp.float32)]
        params = pltpu.CompilerParams(dimension_semantics=("parallel",),
                                      vmem_limit_bytes=vmem_limit)
        if mask is None:
            kernel = functools.partial(_slab_kernel_nomask, c_real=C, inv_l=1.0 / L)
            in_specs = [smem_spec, block_xo]
            args = (w, x)
        else:
            kernel = functools.partial(_slab_kernel_mask, c_real=C)
            in_specs = [smem_spec, block_xo,
                        pl.BlockSpec((TB, L, 1), lambda b: (b, 0, 0))]
            args = (w, x, mask)

        return pl.pallas_call(
            kernel,
            out_shape=jax.ShapeDtypeStruct((B, L, C), x.dtype),
            grid=(nb,),
            in_specs=in_specs,
            out_specs=block_xo,
            scratch_shapes=scratch,
            compiler_params=params,
        )(*args)

    # -------------------- L-tiled two-pass fallback (large L*C) ---------------------
    # Pass 1 accumulates the per-batch channel attention over L tiles; pass 2 applies
    # it.  Costs one extra read of x but fits any L*C inside VMEM.
    if tile_l is not None:
        TL = max(8, _round_up(int(tile_l), 8))
    else:
        per_row = max(2 * C * itemsize + 2 * C * 4,        # pass 1: in bufs + f32 temps
                      4 * C * itemsize)                     # pass 2: in + out bufs
        per_row += 2 * 128 * itemsize if mask is not None else 0
        TL = max(8, ((budget // per_row) // 8) * 8)
    TL = min(TL, _round_up(L, 8))
    nl = _cdiv(L, TL)

    attn_spec = pl.BlockSpec((1, 1, C), lambda b, l: (b, 0, 0))
    x_spec = pl.BlockSpec((1, TL, C), lambda b, l: (b, l, 0))
    m_spec = pl.BlockSpec((1, TL, 1), lambda b, l: (b, l, 0))

    if mask is None:
        attn_kernel = functools.partial(_attn_kernel_nomask, c_real=C, l_real=L, tl=TL)
        in_specs = [smem_spec, x_spec]
        scratch = [pltpu.VMEM((1, 1, Cp), jnp.float32)]
        args = (w, x)
    else:
        attn_kernel = functools.partial(_attn_kernel_mask, c_real=C, l_real=L, tl=TL)
        in_specs = [smem_spec, x_spec, m_spec]
        scratch = [pltpu.VMEM((1, 1, Cp), jnp.float32), pltpu.VMEM((1, 1, 1), jnp.float32)]
        args = (w, x, mask)

    attn = pl.pallas_call(
        attn_kernel,
        out_shape=jax.ShapeDtypeStruct((B, 1, C), jnp.float32),
        grid=(B, nl),
        in_specs=in_specs,
        out_specs=attn_spec,
        scratch_shapes=scratch,
        compiler_params=pltpu.CompilerParams(
            dimension_semantics=("parallel", "arbitrary"), vmem_limit_bytes=vmem_limit),
    )(*args)

    if mask is None:
        apply_kernel = _apply_kernel_nomask
        in_specs = [attn_spec, x_spec]
        args = (attn, x)
    else:
        apply_kernel = _apply_kernel_mask
        in_specs = [attn_spec, x_spec, m_spec]
        args = (attn, x, mask)

    return pl.pallas_call(
        apply_kernel,
        out_shape=jax.ShapeDtypeStruct((B, L, C), x.dtype),
        grid=(B, nl),
        in_specs=in_specs,
        out_specs=x_spec,
        compiler_params=pltpu.CompilerParams(
            dimension_semantics=("parallel", "parallel"), vmem_limit_bytes=vmem_limit),
    )(*args)


# -------------------------------- reference & self-test --------------------------------

def _reference_eca(x, conv_weight, seq_mask=None):
    """Pure-jnp reference mirroring the PyTorch forward (for validation)."""
    B, L, C = x.shape
    if seq_mask is None:
        mask = jnp.ones((B, L), dtype=jnp.float32)
    else:
        mask = seq_mask.astype(jnp.float32)
    mask3 = mask[:, :, None]                                          # (B, L, 1)
    xf = x.astype(jnp.float32)
    mean = jnp.sum(xf * mask3, axis=1) / jnp.sum(mask3, axis=1)       # (B, C)

    k = conv_weight.shape[0]
    pad = (k - 1) // 2
    mean_p = jnp.pad(mean, ((0, 0), (pad, pad)))
    conv = jnp.zeros_like(mean)
    for t in range(k):
        conv = conv + conv_weight[t] * mean_p[:, t:t + C]             # cross-correlation
    attn = jax.nn.sigmoid(conv)[:, None, :]                           # (B, 1, C)

    skip = xf if seq_mask is None else xf * mask3
    return (attn * skip).astype(x.dtype)


if __name__ == "__main__":
    key = jax.random.PRNGKey(0)
    k_x, k_w, k_m, k_x2, k_m2 = jax.random.split(key, 5)

    conv_weight = jax.random.normal(k_w, (KERNEL_SIZE,), dtype=jnp.float32) * 0.2

    # --- single-pass path (B=2, L=8, C=32) ------------------------------------------
    B, L, C = 2, 8, 32
    x = jax.random.normal(k_x, (B, L, C), dtype=jnp.float32)

    out = jax.block_until_ready(eca_forward(x, conv_weight))
    ref = _reference_eca(x, conv_weight)
    assert out.shape == ref.shape
    assert jnp.allclose(out, ref, atol=1e-5, rtol=1e-5)

    seq_mask = (jax.random.uniform(k_m, (B, L)) > 0.3).astype(jnp.float32)
    seq_mask = seq_mask.at[:, 0].set(1.0)        # keep >=1 valid position per row
    out_m = jax.block_until_ready(eca_forward(x, conv_weight, seq_mask))
    ref_m = _reference_eca(x, conv_weight, seq_mask)
    assert jnp.allclose(out_m, ref_m, atol=1e-5, rtol=1e-5)

    # --- L-tiled two-pass fallback (forced; L=24, TL=8 -> 3 accumulate steps) --------
    B2, L2, C2 = 2, 24, 32
    x2 = jax.random.normal(k_x2, (B2, L2, C2), dtype=jnp.float32)

    out_t = jax.block_until_ready(eca_forward(x2, conv_weight, force_tiled=True, tile_l=8))
    ref_t = _reference_eca(x2, conv_weight)
    assert jnp.allclose(out_t, ref_t, atol=1e-5, rtol=1e-5)

    seq_mask2 = (jax.random.uniform(k_m2, (B2, L2)) > 0.3).astype(jnp.float32)
    seq_mask2 = seq_mask2.at[:, 0].set(1.0)
    out_tm = jax.block_until_ready(
        eca_forward(x2, conv_weight, seq_mask2, force_tiled=True, tile_l=8))
    ref_tm = _reference_eca(x2, conv_weight, seq_mask2)
    assert jnp.allclose(out_tm, ref_tm, atol=1e-5, rtol=1e-5)

    print("KERNEL_OK")
</pallas_src>

<mosaic_0001>
module attributes {stable_mosaic.version = 11 : i64} {
  func.func @_slab_kernel_nomask(%arg0: i32, %arg1: memref<5xf32, #tpu.memory_space<smem>>, %arg2: memref<1x8x32xf32, #tpu.memory_space<vmem>>, %arg3: memref<1x8x32xf32, #tpu.memory_space<vmem>>, %arg4: memref<1x1x128xf32, #tpu.memory_space<vmem>>) attributes {dimension_semantics = [#tpu.dimension_semantics<parallel>], iteration_bounds = array<i64: 2>, scalar_prefetch = 0 : i64, scratch_operands = 1 : i64, tpu.core_type = #tpu.core_type<tc>, window_params = [{transform_indices = @transform_0, window_bounds = array<i64: 5>}, {transform_indices = @transform_1, window_bounds = array<i64: 1, 8, 32>}, {transform_indices = @transform_2, window_bounds = array<i64: 1, 8, 32>}]} {
    %c0 = arith.constant 0 : index
    %c0_0 = arith.constant 0 : index
    %c0_1 = arith.constant 0 : index
    %0 = vector.load %arg2[%c0, %c0_0, %c0_1] : memref<1x8x32xf32, #tpu.memory_space<vmem>>, vector<1x8x32xf32>
    %cst = arith.constant dense<0.000000e+00> : vector<1x32xf32>
    %1 = vector.multi_reduction <add>, %0, %cst [1] : vector<1x8x32xf32> to vector<1x32xf32>
    %2 = vector.shape_cast %1 : vector<1x32xf32> to vector<1x1x32xf32>
    %cst_2 = arith.constant 1.250000e-01 : f32
    %3 = vector.broadcast %cst_2 : f32 to vector<1x1x32xf32>
    %4 = arith.mulf %2, %3 : vector<1x1x32xf32>
    %cst_3 = arith.constant 0.000000e+00 : f32
    %5 = vector.broadcast %cst_3 : f32 to vector<1x1x128xf32>
    %c0_4 = arith.constant 0 : index
    %c0_5 = arith.constant 0 : index
    %c0_6 = arith.constant 0 : index
    %6 = vector.load %arg4[%c0_4, %c0_5, %c0_6] : memref<1x1x128xf32, #tpu.memory_space<vmem>>, vector<1x1x128xf32>
    tpu.vector_store %arg4[%c0_4, %c0_5, %c0_6], %5 {strides = array<i32>} : memref<1x1x128xf32, #tpu.memory_space<vmem>>, vector<1x1x128xf32>,
    %c0_7 = arith.constant 0 : index
    %c0_8 = arith.constant 0 : index
    %c0_9 = arith.constant 0 : index
    %7 = vector.load %arg4[%c0_7, %c0_8, %c0_9] : memref<1x1x128xf32, #tpu.memory_space<vmem>>, vector<1x1x32xf32>
    tpu.vector_store %arg4[%c0_7, %c0_8, %c0_9], %4 {strides = array<i32>} : memref<1x1x128xf32, #tpu.memory_space<vmem>>, vector<1x1x32xf32>,
    %c0_10 = arith.constant 0 : index
    %c0_11 = arith.constant 0 : index
    %c0_12 = arith.constant 0 : index
    %8 = vector.load %arg4[%c0_10, %c0_11, %c0_12] : memref<1x1x128xf32, #tpu.memory_space<vmem>>, vector<1x1x128xf32>
    %9 = tpu.iota {dimensions = array<i32: 2>} : vector<1x1x128xi32>
    %cst_13 = arith.constant 0.000000e+00 : f32
    %10 = vector.broadcast %cst_13 : f32 to vector<1x1x128xf32>
    %c2_i32 = arith.constant 2 : i32
    %11 = tpu.dynamic_rotate %8 by %c2_i32 dim 2 : vector<1x1x128xf32>, i32 -> vector<1x1x128xf32>
    %c-2_i32 = arith.constant -2 : i32
    %12 = vector.broadcast %c-2_i32 : i32 to vector<1x1x128xi32>
    %13 = arith.addi %9, %12 : vector<1x1x128xi32>
    %c0_i32 = arith.constant 0 : i32
    %14 = vector.broadcast %c0_i32 : i32 to vector<1x1x128xi32>
    %15 = arith.cmpi sge, %13, %14 : vector<1x1x128xi32>
    %c-2_i32_14 = arith.constant -2 : i32
    %16 = vector.broadcast %c-2_i32_14 : i32 to vector<1x1x128xi32>
    %17 = arith.addi %9, %16 : vector<1x1x128xi32>
    %c32_i32 = arith.constant 32 : i32
    %18 = vector.broadcast %c32_i32 : i32 to vector<1x1x128xi32>
    %19 = arith.cmpi slt, %17, %18 : vector<1x1x128xi32>
    %20 = arith.andi %15, %19 : vector<1x1x128xi1>
    %c0_15 = arith.constant 0 : index
    %21 = memref.load %arg1[%c0_15] : memref<5xf32, #tpu.memory_space<smem>>
    %cst_16 = arith.constant 0.000000e+00 : f32
    %22 = vector.broadcast %cst_16 : f32 to vector<1x1x128xf32>
    %23 = arith.select %20, %11, %22 : vector<1x1x128xi1>, vector<1x1x128xf32>
    %24 = vector.broadcast %21 : f32 to vector<1x1x128xf32>
    %25 = arith.mulf %24, %23 : vector<1x1x128xf32>
    %26 = arith.addf %10, %25 : vector<1x1x128xf32>
    %c1_i32 = arith.constant 1 : i32
    %27 = tpu.dynamic_rotate %8 by %c1_i32 dim 2 : vector<1x1x128xf32>, i32 -> vector<1x1x128xf32>
    %c-1_i32 = arith.constant -1 : i32
    %28 = vector.broadcast %c-1_i32 : i32 to vector<1x1x128xi32>
    %29 = arith.addi %9, %28 : vector<1x1x128xi32>
    %c0_i32_17 = arith.constant 0 : i32
    %30 = vector.broadcast %c0_i32_17 : i32 to vector<1x1x128xi32>
    %31 = arith.cmpi sge, %29, %30 : vector<1x1x128xi32>
    %c-1_i32_18 = arith.constant -1 : i32
    %32 = vector.broadcast %c-1_i32_18 : i32 to vector<1x1x128xi32>
    %33 = arith.addi %9, %32 : vector<1x1x128xi32>
    %c32_i32_19 = arith.constant 32 : i32
    %34 = vector.broadcast %c32_i32_19 : i32 to vector<1x1x128xi32>
    %35 = arith.cmpi slt, %33, %34 : vector<1x1x128xi32>
    %36 = arith.andi %31, %35 : vector<1x1x128xi1>
    %c1 = arith.constant 1 : index
    %37 = memref.load %arg1[%c1] : memref<5xf32, #tpu.memory_space<smem>>
    %cst_20 = arith.constant 0.000000e+00 : f32
    %38 = vector.broadcast %cst_20 : f32 to vector<1x1x128xf32>
    %39 = arith.select %36, %27, %38 : vector<1x1x128xi1>, vector<1x1x128xf32>
    %40 = vector.broadcast %37 : f32 to vector<1x1x128xf32>
    %41 = arith.mulf %40, %39 : vector<1x1x128xf32>
    %42 = arith.addf %26, %41 : vector<1x1x128xf32>
    %c0_i32_21 = arith.constant 0 : i32
    %43 = vector.broadcast %c0_i32_21 : i32 to vector<1x1x128xi32>
    %44 = arith.addi %9, %43 : vector<1x1x128xi32>
    %c0_i32_22 = arith.constant 0 : i32
    %45 = vector.broadcast %c0_i32_22 : i32 to vector<1x1x128xi32>
    %46 = arith.cmpi sge, %44, %45 : vector<1x1x128xi32>
    %c0_i32_23 = arith.constant 0 : i32
    %47 = vector.broadcast %c0_i32_23 : i32 to vector<1x1x128xi32>
    %48 = arith.addi %9, %47 : vector<1x1x128xi32>
    %c32_i32_24 = arith.constant 32 : i32
    %49 = vector.broadcast %c32_i32_24 : i32 to vector<1x1x128xi32>
    %50 = arith.cmpi slt, %48, %49 : vector<1x1x128xi32>
    %51 = arith.andi %46, %50 : vector<1x1x128xi1>
    %c2 = arith.constant 2 : index
    %52 = memref.load %arg1[%c2] : memref<5xf32, #tpu.memory_space<smem>>
    %cst_25 = arith.constant 0.000000e+00 : f32
    %53 = vector.broadcast %cst_25 : f32 to vector<1x1x128xf32>
    %54 = arith.select %51, %8, %53 : vector<1x1x128xi1>, vector<1x1x128xf32>
    %55 = vector.broadcast %52 : f32 to vector<1x1x128xf32>
    %56 = arith.mulf %55, %54 : vector<1x1x128xf32>
    %57 = arith.addf %42, %56 : vector<1x1x128xf32>
    %c127_i32 = arith.constant 127 : i32
    %58 = tpu.dynamic_rotate %8 by %c127_i32 dim 2 : vector<1x1x128xf32>, i32 -> vector<1x1x128xf32>
    %c1_i32_26 = arith.constant 1 : i32
    %59 = vector.broadcast %c1_i32_26 : i32 to vector<1x1x128xi32>
    %60 = arith.addi %9, %59 : vector<1x1x128xi32>
    %c0_i32_27 = arith.constant 0 : i32
    %61 = vector.broadcast %c0_i32_27 : i32 to vector<1x1x128xi32>
    %62 = arith.cmpi sge, %60, %61 : vector<1x1x128xi32>
    %c1_i32_28 = arith.constant 1 : i32
    %63 = vector.broadcast %c1_i32_28 : i32 to vector<1x1x128xi32>
    %64 = arith.addi %9, %63 : vector<1x1x128xi32>
    %c32_i32_29 = arith.constant 32 : i32
    %65 = vector.broadcast %c32_i32_29 : i32 to vector<1x1x128xi32>
    %66 = arith.cmpi slt, %64, %65 : vector<1x1x128xi32>
    %67 = arith.andi %62, %66 : vector<1x1x128xi1>
    %c3 = arith.constant 3 : index
    %68 = memref.load %arg1[%c3] : memref<5xf32, #tpu.memory_space<smem>>
    %cst_30 = arith.constant 0.000000e+00 : f32
    %69 = vector.broadcast %cst_30 : f32 to vector<1x1x128xf32>
    %70 = arith.select %67, %58, %69 : vector<1x1x128xi1>, vector<1x1x128xf32>
    %71 = vector.broadcast %68 : f32 to vector<1x1x128xf32>
    %72 = arith.mulf %71, %70 : vector<1x1x128xf32>
    %73 = arith.addf %57, %72 : vector<1x1x128xf32>
    %c126_i32 = arith.constant 126 : i32
    %74 = tpu.dynamic_rotate %8 by %c126_i32 dim 2 : vector<1x1x128xf32>, i32 -> vector<1x1x128xf32>
    %c2_i32_31 = arith.constant 2 : i32
    %75 = vector.broadcast %c2_i32_31 : i32 to vector<1x1x128xi32>
    %76 = arith.addi %9, %75 : vector<1x1x128xi32>
    %c0_i32_32 = arith.constant 0 : i32
    %77 = vector.broadcast %c0_i32_32 : i32 to vector<1x1x128xi32>
    %78 = arith.cmpi sge, %76, %77 : vector<1x1x128xi32>
    %c2_i32_33 = arith.constant 2 : i32
    %79 = vector.broadcast %c2_i32_33 : i32 to vector<1x1x128xi32>
    %80 = arith.addi %9, %79 : vector<1x1x128xi32>
    %c32_i32_34 = arith.constant 32 : i32
    %81 = vector.broadcast %c32_i32_34 : i32 to vector<1x1x128xi32>
    %82 = arith.cmpi slt, %80, %81 : vector<1x1x128xi32>
    %83 = arith.andi %78, %82 : vector<1x1x128xi1>
    %c4 = arith.constant 4 : index
    %84 = memref.load %arg1[%c4] : memref<5xf32, #tpu.memory_space<smem>>
    %cst_35 = arith.constant 0.000000e+00 : f32
    %85 = vector.broadcast %cst_35 : f32 to vector<1x1x128xf32>
    %86 = arith.select %83, %74, %85 : vector<1x1x128xi1>, vector<1x1x128xf32>
    %87 = vector.broadcast %84 : f32 to vector<1x1x128xf32>
    %88 = arith.mulf %87, %86 : vector<1x1x128xf32>
    %89 = arith.addf %73, %88 : vector<1x1x128xf32>
    %90 = arith.negf %89 : vector<1x1x128xf32>
    %91 = math.exp %90 : vector<1x1x128xf32>
    %cst_36 = arith.constant 1.000000e+00 : f32
    %92 = vector.broadcast %cst_36 : f32 to vector<1x1x128xf32>
    %93 = arith.addf %92, %91 : vector<1x1x128xf32>
    %94 = arith.divf %92, %93 : vector<1x1x128xf32>
    %95 = vector.extract_strided_slice %94 {offsets = [0, 0, 0], sizes = [1, 1, 32], strides = [1, 1, 1]} : vector<1x1x128xf32> to vector<1x1x32xf32>
    %c0_37 = arith.constant 0 : index
    %c0_38 = arith.constant 0 : index
    %c0_39 = arith.constant 0 : index
    %96 = vector.load %arg2[%c0_37, %c0_38, %c0_39] : memref<1x8x32xf32, #tpu.memory_space<vmem>>, vector<1x8x32xf32>
    %97 = vector.broadcast %95 : vector<1x1x32xf32> to vector<1x8x32xf32>
    %98 = arith.mulf %96, %97 : vector<1x8x32xf32>
    %c0_40 = arith.constant 0 : index
    %c0_41 = arith.constant 0 : index
    %c0_42 = arith.constant 0 : index
    %99 = vector.load %arg3[%c0_40, %c0_41, %c0_42] : memref<1x8x32xf32, #tpu.memory_space<vmem>>, vector<1x8x32xf32>
    tpu.vector_store %arg3[%c0_40, %c0_41, %c0_42], %98 {strides = array<i32>} : memref<1x8x32xf32, #tpu.memory_space<vmem>>, vector<1x8x32xf32>,
    return
  }
  func.func @transform_0(%arg0: i32) -> i32 {
    %c0_i32 = arith.constant 0 : i32
    %c0_i32_0 = arith.constant 0 : i32
    return %c0_i32 : i32
  }
  func.func @transform_1(%arg0: i32) -> (i32, i32, i32) {
    %c0_i32 = arith.constant 0 : i32
    %c0_i32_0 = arith.constant 0 : i32
    %c0_i32_1 = arith.constant 0 : i32
    return %arg0, %c0_i32, %c0_i32_0 : i32, i32, i32
  }
  func.func @transform_2(%arg0: i32) -> (i32, i32, i32) {
    %c0_i32 = arith.constant 0 : i32
    %c0_i32_0 = arith.constant 0 : i32
    %c0_i32_1 = arith.constant 0 : i32
    return %arg0, %c0_i32, %c0_i32_0 : i32, i32, i32
  }
}

</mosaic_0001>

<llo_original>
// kernel: tpu_custom_call.1
$region0: #{tpu_custom_call.1}
  #allocation0 [shape = 'u32[]', space=smem, size = 0x4, offset = 0x4, fixed_abs, tag = 'smem constant byte address 0x4 - core index']
  #allocation1 [shape = 'u32[72,128]{1,0:T(1,128)}', space=vmem, size = 0x9000, scoped, tag = 'internal scratch']
  #allocation2 [shape = 'f32[1,1,128]{2,1,0:T(1,128)}', space=vmem, size = 0x200, scoped, tag = 'scratch operand']
  %s0 = inlined_call_operand.hbm [shape: f32[5], index: 0, kind: input, shape index: {}]
  %s1 = inlined_call_operand.hbm [shape: f32[2,8,32], index: 1, kind: input, shape index: {}]
  %s2 = inlined_call_operand.hbm [shape: f32[2,8,32], index: 2, kind: output, shape index: {}]
  %s3 = sld [smem:[#allocation0]]
  $region49: #{tpu_custom_call.1} parent=0
    _
  %s5 = ssub.s32 1, %s3
  %s6 = scalar_select 0, %s5, %s3
  $region1: #{tpu_custom_call.1} parent=0
    #allocation3 [shape = 'u8[512]{0}', space=smem, size = 0x200, scoped, tag = 'input window, operand 0, single buffered']
    #allocation4 [shape = 's32[2]{0}', space=sflag, size = 0x8, scoped, tag = 'scoped memory for tpu_custom_call.1']
    #allocation5 [shape = 's32[2]{0}', space=sflag, size = 0x8, scoped, tag = 'scoped memory for tpu_custom_call.1']
    #allocation6 [shape = 's32[2]{0}', space=sflag, size = 0x8, scoped, tag = 'scoped memory for tpu_custom_call.1']
    #allocation7 [shape = 'u8[8192]{0}', space=vmem, size = 0x2000, scoped, tag = 'input window, operand 1']
    #allocation8 [shape = 'u8[8192]{0}', space=vmem, size = 0x2000, scoped, tag = 'output window, operand 0']
    %7 = vsyncpa [#allocation6], 0
    %8 = vsyncpa [#allocation4], 0
    %s9 = scalar_lea.sflag [#allocation4], 1
    %10 = vsyncpa %s9, 0
    %11 = vsyncpa [#allocation5], 0
    %s12 = scalar_lea.sflag [#allocation5], 1
    %13 = vsyncpa %s12, 0
    loop: start=0, step=1, limit=4
    $region2: #{tpu_custom_call.1} parent=1 // loop_pre_header
      _
    $region3: #{tpu_custom_call.1} parent=1 // loop_header
      %s15 = sphi 0, %s19
      %p16 = scmp.ge.s32.totalorder %s15, 4
      %s23 = sphi 0, %s23
      %s25 = sphi 0, %s23
      %s26 = sphi 0, %s25
      %s40 = sphi 0, %s26
      %s46 = sphi 0, %s48
      %s49 = sphi 0, %s46
      %s50 = sphi 0, %s49
      %s66 = sphi 0, %s50
      %s72 = sphi 0, %s74
      %s75 = sphi 0, %s72
      %s76 = sphi 0, %s75
      %s92 = sphi 0, %s76
    $region4: #{tpu_custom_call.1} parent=1 // loop_header_branch
      %18 = sbr.rel (%p16) target = $region8
    $region5: #{tpu_custom_call.1} parent=1 // loop_body
      %s20 = ssub.s32 %s15, 1
      %s21 = ssub.s32 %s15, 2
      %s22 = sadd.s32 %s15, 1
      %s24 = sadd.s32 %s23, 1
      %p27 = scmp.eq.s32.totalorder %s15, 1
      %p28 = scmp.ne.s32.totalorder %s23, %s25
      %p29 = scmp.eq.s32.totalorder %s15, 0
      %p30 = por %p28, %p29
      %p31 = scmp.ne.s32.totalorder %s23, %s25
      %p32 = scmp.eq.s32.totalorder %s20, 1
      %p33 = por %p31, %p32
      %p34 = scmp.ne.s32.totalorder %s25, %s26
      %p35 = scmp.eq.s32.totalorder %s20, 0
      %p36 = por %p34, %p35
      %p37 = scmp.ne.s32.totalorder %s25, %s26
      %p38 = scmp.eq.s32.totalorder %s21, 1
      %p39 = por %p37, %p38
      %p41 = scmp.ne.s32.totalorder %s26, %s40
      %p42 = scmp.eq.s32.totalorder %s21, 0
      %p43 = por %p41, %p42
      %s44 = ssub.s32 %s15, %s22
      %p45 = scmp.eq.s32.totalorder %s44, 0
      %s47 = sadd.s32 %s46, 1
      %s48 = scalar_select %p45, %s46, %s47
      %p51 = pneg %p45
      %p52 = scmp.eq.s32.totalorder %s15, 1
      %p53 = por %p51, %p52
      %p54 = scmp.ne.s32.totalorder %s46, %s49
      %p55 = scmp.eq.s32.totalorder %s15, 0
      %p56 = por %p54, %p55
      %p57 = scmp.ne.s32.totalorder %s46, %s49
      %p58 = scmp.eq.s32.totalorder %s20, 1
      %p59 = por %p57, %p58
      %p60 = scmp.ne.s32.totalorder %s49, %s50
      %p61 = scmp.eq.s32.totalorder %s20, 0
      %p62 = por %p60, %p61
      %p63 = scmp.ne.s32.totalorder %s49, %s50
      %p64 = scmp.eq.s32.totalorder %s21, 1
      %p65 = por %p63, %p64
      %p67 = scmp.ne.s32.totalorder %s50, %s66
      %p68 = scmp.eq.s32.totalorder %s21, 0
      %p69 = por %p67, %p68
      %s70 = ssub.s32 %s15, %s22
      %p71 = scmp.eq.s32.totalorder %s70, 0
      %s73 = sadd.s32 %s72, 1
      %s74 = scalar_select %p71, %s72, %s73
      %p77 = pneg %p71
      %p78 = scmp.eq.s32.totalorder %s15, 1
      %p79 = por %p77, %p78
      %p80 = scmp.ne.s32.totalorder %s72, %s75
      %p81 = scmp.eq.s32.totalorder %s15, 0
      %p82 = por %p80, %p81
      %p83 = scmp.ne.s32.totalorder %s72, %s75
      %p84 = scmp.eq.s32.totalorder %s20, 1
      %p85 = por %p83, %p84
      %p86 = scmp.ne.s32.totalorder %s75, %s76
      %p87 = scmp.eq.s32.totalorder %s20, 0
      %p88 = por %p86, %p87
      %p89 = scmp.ne.s32.totalorder %s75, %s76
      %p90 = scmp.eq.s32.totalorder %s21, 1
      %p91 = por %p89, %p90
      %p93 = scmp.ne.s32.totalorder %s76, %s92
      %p94 = scmp.eq.s32.totalorder %s21, 0
      %p95 = por %p93, %p94
      %p96 = scmp.le.s32.totalorder 1, %s15
      %p97 = scmp.lt.s32.totalorder %s15, 3
      %p98 = pnand %p96, %p97
      %p99 = pneg %p98
      // Predicated region
      $region9: #{tpu_custom_call.1} parent=5 // pred_check
        _
      $region10: #{tpu_custom_call.1} parent=5 // pred_check_branch
        %101 = sbr.rel (%p98) target = $region12
      $region11: #{tpu_custom_call.1} parent=5 // pred_region
        %s102 = ssub.s32 %s15, 1
        // Predicated region
        $region13: #{tpu_custom_call.1} parent=11 // pred_check
          %p103 = pneg %p36
        $region14: #{tpu_custom_call.1} parent=11 // pred_check_branch
          %105 = sbr.rel (%p103) target = $region16
        $region15: #{tpu_custom_call.1} parent=11 // pred_region
          %107 = vsyncadd [#allocation6], 0
          %s109 = sshll.u32 %s0, 4
          %s110 = int_to_ptr.hbm [resolvable:$true] %s109
          %112 = dma.hbm_to_smem %s110, 16, [#allocation3], [#allocation6]
        $region16: #{tpu_custom_call.1} parent=11 // pred_fallthru
          _
      $region12: #{tpu_custom_call.1} parent=5 // pred_fallthru
        _
      %p113 = scmp.lt.s32.totalorder %s15, 2
      // Predicated region
      $region17: #{tpu_custom_call.1} parent=5 // pred_check
        %p114 = pneg %p113
      $region18: #{tpu_custom_call.1} parent=5 // pred_check_branch
        %116 = sbr.rel (%p114) target = $region20
      $region19: #{tpu_custom_call.1} parent=5 // pred_region
        // Predicated region
        $region21: #{tpu_custom_call.1} parent=19 // pred_check
          %p117 = pneg %p56
        $region22: #{tpu_custom_call.1} parent=19 // pred_check_branch
          %119 = sbr.rel (%p117) target = $region24
        $region23: #{tpu_custom_call.1} parent=19 // pred_region
          %s120 = sand.u32 %s46, 1
          %s121 = scalar_lea.sflag [#allocation4], %s120
          %s122 = sand.u32 %s46, 1
          %s123 = smul.addr %s122, 8
          %s124 = scalar_lea.vmem [#allocation7], %s123
          %126 = vsyncadd %s121, 0
          %s127 = smul.addr %s15, 8
          %s128 = scalar_lea.hbm %s1, %s127
          %s130 = sshll.u32 %s128, 4
          %s131 = int_to_ptr.hbm [resolvable:$true] %s130
          %s132 = sshll.u32 %s124, 4
          %s133 = int_to_ptr.vmem [resolvable:$true] %s132
          %135 = dma.hbm_to_vmem [thread:$0]  %s131, 128, %s133, %s121
        $region24: #{tpu_custom_call.1} parent=19 // pred_fallthru
          _
      $region20: #{tpu_custom_call.1} parent=5 // pred_fallthru
        _
      %p136 = scmp.le.s32.totalorder 1, %s15
      %p137 = scmp.lt.s32.totalorder %s15, 3
      %p138 = pnand %p136, %p137
      %p139 = pneg %p138
      // Predicated region
      $region25: #{tpu_custom_call.1} parent=5 // pred_check
        _
      $region26: #{tpu_custom_call.1} parent=5 // pred_check_branch
        %141 = sbr.rel (%p138) target = $region28
      $region27: #{tpu_custom_call.1} parent=5 // pred_region
        %s142 = ssub.s32 %s15, 1
        // Predicated region
        $region29: #{tpu_custom_call.1} parent=27 // pred_check
          %p143 = pneg %p36
        $region30: #{tpu_custom_call.1} parent=27 // pred_check_branch
          %145 = sbr.rel (%p143) target = $region32
        $region31: #{tpu_custom_call.1} parent=27 // pred_region
          %147 = dma.done [#allocation6], 16
        $region32: #{tpu_custom_call.1} parent=27 // pred_fallthru
          _
        %s148 = sand.u32 %s49, 1
        %s149 = scalar_lea.sflag [#allocation4], %s148
        %s150 = sand.u32 %s49, 1
        %s151 = smul.addr %s150, 8
        %s152 = scalar_lea.vmem [#allocation7], %s151
        // Predicated region
        $region33: #{tpu_custom_call.1} parent=27 // pred_check
          %p153 = pneg %p62
        $region34: #{tpu_custom_call.1} parent=27 // pred_check_branch
          %155 = sbr.rel (%p153) target = $region36
        $region35: #{tpu_custom_call.1} parent=27 // pred_region
          %157 = dma.done %s149, 128
        $region36: #{tpu_custom_call.1} parent=27 // pred_fallthru
          _
        %158 = sfence
        %p159 = pneg %p36
        %p160 = pneg %p33
        %s161 = sand.u32 %s49, 1
        %s162 = scalar_lea.sflag [#allocation4], %s161
        %s163 = sand.u32 %s49, 1
        %s164 = smul.addr %s163, 8
        %s165 = scalar_lea.vmem [#allocation7], %s164
        %p166 = pneg %p62
        %p167 = pneg %p59
        %p168 = pneg %p88
        %p169 = pneg %p85
        %s170 = sand.u32 %s75, 1
        %s171 = scalar_lea.sflag [#allocation5], %s170
        %s172 = sand.u32 %s75, 1
        %s173 = smul.addr %s172, 8
        %s174 = scalar_lea.vmem [#allocation8], %s173
        %v175 = vld [vmem:[%s152] sm:$0xff]
        %vm176 = vcmask 261120
        %v177 = vsel %vm176, %v175, 0.0
        %v178 = vrot.slane %v177, 4
        %v179 = vadd.f32 %v177, %v178
        %v180 = vrot.slane %v179, 2
        %v181 = vadd.f32 %v179, %v180
        %v182 = vrot.slane %v181, 1
        %v183 = vadd.f32 %v181, %v182
        %v184 = vmul.f32 %v183, 0.125
        %185 = vst [vmem:[#allocation2] sm:$0x1] 0.0
        %vm186 = vcmask 253952
        %187 = vst.msk [vmem:[#allocation2] sm:$0x1] %vm186, %v184
        %v188 = vld [vmem:[#allocation2] sm:$0x1]
        %v189 = vlaneseq
        %v190 = vand.u32 %v189, 127
        %191 = vrot.lane.b32.xlu0 %v188, 2
        %v192 = vpop.permute.xlu0 %191
        %v193 = vadd.s32 %v190, 4294967294
        %vm194 = vcmp.ge.s32.totalorder %v193, 0
        %vm195 = vcmp.lt.s32.totalorder %v193, 32
        %vm196 = vmand %vm194, %vm195
        %s197 = sld [smem:[#allocation3]]
        %v198 = vsel %vm196, %v192, 0.0
        %v199 = vstv %s197
        %v200 = vmul.f32 %v199, %v198
        %v201 = vadd.f32 %v200, 0.0
        %202 = vrot.lane.b32.xlu0 %v188, 1
        %v203 = vpop.permute.xlu0 %202
        %v204 = vadd.s32 %v190, 4294967295
        %vm205 = vcmp.ge.s32.totalorder %v204, 0
        %vm206 = vcmp.lt.s32.totalorder %v204, 32
        %vm207 = vmand %vm205, %vm206
        %s208 = sld [smem:[#allocation3 + $0x1]]
        %v209 = vsel %vm207, %v203, 0.0
        %v210 = vstv %s208
        %v211 = vmul.f32 %v210, %v209
        %v212 = vadd.f32 %v201, %v211
        %vm213 = vcmp.ge.s32.totalorder %v190, 0
        %vm214 = vcmp.lt.s32.totalorder %v190, 32
        %vm215 = vmand %vm213, %vm214
        %s216 = sld [smem:[#allocation3 + $0x2]]
        %v217 = vsel %vm215, %v188, 0.0
        %v218 = vstv %s216
        %v219 = vmul.f32 %v218, %v217
        %v220 = vadd.f32 %v212, %v219
        %221 = vrot.lane.b32.xlu0 %v188, 127
        %v222 = vpop.permute.xlu0 %221
        %v223 = vadd.s32 %v190, 1
        %vm224 = vcmp.ge.s32.totalorder %v223, 0
        %vm225 = vcmp.lt.s32.totalorder %v223, 32
        %vm226 = vmand %vm224, %vm225
        %s227 = sld [smem:[#allocation3 + $0x3]]
        %v228 = vsel %vm226, %v222, 0.0
        %v229 = vstv %s227
        %v230 = vmul.f32 %v229, %v228
        %v231 = vadd.f32 %v220, %v230
        %232 = vrot.lane.b32.xlu0 %v188, 126
        %v233 = vpop.permute.xlu0 %232
        %v234 = vadd.s32 %v190, 2
        %vm235 = vcmp.ge.s32.totalorder %v234, 0
        %vm236 = vcmp.lt.s32.totalorder %v234, 32
        %vm237 = vmand %vm235, %vm236
        %s238 = sld [smem:[#allocation3 + $0x4]]
        %v239 = vsel %vm237, %v233, 0.0
        %v240 = vstv %s238
        %v241 = vmul.f32 %v240, %v239
        %v242 = vadd.f32 %v231, %v241
        %v243 = vxor.u32 %v242, 2147483648
        %v244 = vmul.f32 %v243, 1.442695
        %v245 = vpow.pop %v244
        %v246 = vadd.f32 %v245, 1.0
        %v247 = vrcp.pop %v246
        %v248 = vmul.f32 %v246, %v247
        %v249 = vsub.f32 1.0, %v248
        %v250 = vmul.f32 %v247, %v249
        %v251 = vadd.f32 %v247, %v250
        %vm252 = vweird.f32 %v246
        %vm253 = vweird.f32 %v247
        %vm254 = vmor %vm252, %vm253
        %v255 = vsel %vm254, %v247, %v251
        %v256 = vand.u32 2147483647, %v246
        %vm257 = vcmp.eq.f32.partialorder %v256, 8.507059e+37
        %v258 = vand.u32 %v246, 2147483648
        %v259 = vor.u32 1.1754944e-38, %v258
        %v260 = vsel %vm257, %v259, %v255
        %v261 = vmul.f32 1.0, %v260
        %v262 = vld [vmem:[%s152] sm:$0xff]
        %v263 = vperm.slane %v261, 0
        %v264 = vmul.f32 %v262, %v263
        %265 = vst.msk [vmem:[%s174] sm:$0xff] %vm176, %v264
        %s266 = sand.u32 %s75, 1
        %s267 = scalar_lea.sflag [#allocation5], %s266
        %s268 = sand.u32 %s75, 1
        %s269 = smul.addr %s268, 8
        %s270 = scalar_lea.vmem [#allocation8], %s269
        // Predicated region
        $region37: #{tpu_custom_call.1} parent=27 // pred_check
          %p271 = pneg %p85
        $region38: #{tpu_custom_call.1} parent=27 // pred_check_branch
          %273 = sbr.rel (%p271) target = $region40
        $region39: #{tpu_custom_call.1} parent=27 // pred_region
          %275 = vsyncadd %s267, 0
          %s276 = smul.addr %s20, 8
          %s277 = scalar_lea.hbm %s2, %s276
          %s279 = sshll.u32 %s270, 4
          %s280 = int_to_ptr.vmem [resolvable:$true] %s279
          %s281 = sshll.u32 %s277, 4
          %s282 = int_to_ptr.hbm [resolvable:$true] %s281
          %284 = dma.vmem_to_hbm [thread:$0]  %s280, 128, %s282, %s267
        $region40: #{tpu_custom_call.1} parent=27 // pred_fallthru
          _
      $region28: #{tpu_custom_call.1} parent=5 // pred_fallthru
        _
      %p285 = scmp.le.s32.totalorder 2, %s15
      // Predicated region
      $region41: #{tpu_custom_call.1} parent=5 // pred_check
        %p286 = pneg %p285
      $region42: #{tpu_custom_call.1} parent=5 // pred_check_branch
        %288 = sbr.rel (%p286) target = $region44
      $region43: #{tpu_custom_call.1} parent=5 // pred_region
        %s289 = ssub.s32 %s15, 2
        // Predicated region
        $region45: #{tpu_custom_call.1} parent=43 // pred_check
          %p290 = pneg %p91
        $region46: #{tpu_custom_call.1} parent=43 // pred_check_branch
          %292 = sbr.rel (%p290) target = $region48
        $region47: #{tpu_custom_call.1} parent=43 // pred_region
          %s293 = sand.u32 %s76, 1
          %s294 = scalar_lea.sflag [#allocation5], %s293
          %s295 = sand.u32 %s76, 1
          %s296 = smul.addr %s295, 8
          %s297 = scalar_lea.vmem [#allocation8], %s296
          %299 = dma.done %s294, 128
        $region48: #{tpu_custom_call.1} parent=43 // pred_fallthru
          _
      $region44: #{tpu_custom_call.1} parent=5 // pred_fallthru
        _
    $region6: #{tpu_custom_call.1} parent=1 // loop_footer
      %s19 = sadd.s32 1, %s15
    $region7: #{tpu_custom_call.1} parent=1 // loop_footer_branch
      %14 = sbr.rel target = $region3
    $region8: #{tpu_custom_call.1} parent=1 // loop_exit
      _
    %300 = vsyncpa [#allocation4], 1
    %s301 = scalar_lea.sflag [#allocation4], 1
    %302 = vsyncpa %s301, 1
    %303 = vsyncpa [#allocation5], 1
    %s304 = scalar_lea.sflag [#allocation5], 1
    %305 = vsyncpa %s304, 1
    %306 = vsyncpa [#allocation6], 1
    %s307 = scalar_lea.sflag [#allocation6], 1
    %308 = vsyncpa %s307, 1

</llo_original>
